<compile_context>
chip_gen: v7x
topology: tpu7x:2x2x1
jax: 0.10.0
libtpu: 0.0.40
codegen_flags: <defaults>
</compile_context>

<pallas_src>
import jax
import jax.numpy as jnp
from jax.experimental import pallas as pl
from jax.experimental.pallas import tpu as pltpu


def _round_up(n, m):
    return ((n + m - 1) // m) * m


def scale_kernel(xt_ref, w1t_ref, b1_ref, w2st_ref, b2s_ref, yt_ref):
    # xt_ref: (F, tm) batch-on-lane tile; all parameters are VMEM-resident.
    xt = jnp.tanh(xt_ref[...])
    # (H, F) @ (F, tm) -> (H, tm); bias (H, 1) broadcasts across lanes.
    h = jnp.dot(w1t_ref[...], xt, preferred_element_type=jnp.float32) + b1_ref[...]
    h = jnp.maximum(h, 0.0)
    # scale already folded into W2/b2: (F, H) @ (H, tm) -> (F, tm).
    yt_ref[...] = (
        jnp.dot(w2st_ref[...], h, preferred_element_type=jnp.float32) + b2s_ref[...]
    )


def scale_forward(x, params, *, block_cols=2048):
    """x: (B, F) float32.  Returns y: (B, F) = scale * MLP(tanh(x))."""
    B, F = x.shape
    H = params["w1"].shape[1]

    # Lane-dense layout: batch on the lane (last) axis; layout plumbing only.
    xt = x.T                                          # (F, B)
    w1t = params["w1"].T                              # (H, F)
    b1 = params["b1"].reshape(H, 1)                   # (H, 1)
    w2st = (params["w2"] * params["scale"]).T         # (F, H), scale folded in
    b2s = (params["b2"] * params["scale"]).reshape(F, 1)

    # Tile size along the lane (batch) axis:
    #  - small batch: one block covering the full dim (legal even if <128),
    #  - large batch: multiple of 128 lanes, capped at block_cols, and sized
    #    so there are >= 2 grid steps (megacore split on v7x).
    if B <= 128:
        tm = B
    else:
        tm = max(128, min(block_cols, _round_up(pl.cdiv(B, 2), 128)))
    grid = (pl.cdiv(B, tm),)

    def streamed(shape):            # tiles that move with the batch grid
        return pl.BlockSpec(shape, lambda i: (0, i))

    def resident(shape):            # parameters pinned across all grid steps
        return pl.BlockSpec(shape, lambda i: (0, 0))

    cost = pl.CostEstimate(
        flops=4 * B * F * H + 2 * B * (H + F),        # two matmuls + bias/relu
        transcendentals=B * F,                        # tanh
        bytes_accessed=4 * (2 * B * F + 2 * F * H + H + F),
    )

    yt = pl.pallas_call(
        scale_kernel,
        out_shape=jax.ShapeDtypeStruct((F, B), jnp.float32),
        grid=grid,
        in_specs=[
            streamed((F, tm)),       # x^T
            resident((H, F)),        # W1^T
            resident((H, 1)),        # b1
            resident((F, H)),        # (W2*scale)^T
            resident((F, 1)),        # b2*scale
        ],
        out_specs=streamed((F, tm)),
        compiler_params=pltpu.CompilerParams(
            dimension_semantics=("parallel",)),
        cost_estimate=cost,
    )(xt, w1t, b1, w2st, b2s)

    return yt.T


def init_params(key, input_dim, scale_init=0.9):
    """Mirrors Scale.__init__ shapes; Linear weights kept as (in, out)."""
    hidden = input_dim * 2
    keys = jax.random.split(key, 4)

    def lin(kw, kb, fan_in, fan_out):
        bound = 1.0 / jnp.sqrt(fan_in)
        w = jax.random.uniform(kw, (fan_in, fan_out), jnp.float32, -bound, bound)
        b = jax.random.uniform(kb, (fan_out,), jnp.float32, -bound, bound)
        return w, b

    w1, b1 = lin(keys[0], keys[1], input_dim, hidden)
    w2, b2 = lin(keys[2], keys[3], hidden, input_dim)
    scale = jnp.full((input_dim,), scale_init, jnp.float32)
    return dict(w1=w1, b1=b1, w2=w2, b2=b2, scale=scale)


def reference_forward(x, p):
    """Pure-JAX reference mirroring the PyTorch forward."""
    h = jnp.maximum(jnp.tanh(x) @ p["w1"] + p["b1"], 0.0)
    return (h @ p["w2"] + p["b2"]) * p["scale"]


if __name__ == "__main__":
    key = jax.random.PRNGKey(0)
    k_x, k_p, k_x2 = jax.random.split(key, 3)

    INPUT_DIM = 8                 # hidden = 16, matching the PyTorch module
    params = init_params(k_p, INPUT_DIM, scale_init=0.9)

    # Small batch: single lane-dense block (grid of 1).
    x_small = jax.random.normal(k_x, (64, INPUT_DIM), jnp.float32)
    y_small = scale_forward(x_small, params)
    jax.block_until_ready(y_small)
    assert jnp.allclose(
        y_small, reference_forward(x_small, params), atol=1e-5, rtol=1e-5)

    # Larger batch with block_cols=128: forces a 4-step batch grid of
    # 128-lane tiles (exercises streaming + the v7x megacore split path).
    x_big = jax.random.normal(k_x2, (512, INPUT_DIM), jnp.float32)
    y_big = scale_forward(x_big, params, block_cols=128)
    jax.block_until_ready(y_big)
    assert jnp.allclose(
        y_big, reference_forward(x_big, params), atol=1e-5, rtol=1e-5)

    print("KERNEL_OK")
</pallas_src>

<mosaic_0001>
module attributes {stable_mosaic.version = 11 : i64} {
  func.func @scale_kernel(%arg0: i32, %arg1: memref<8x64xf32, #tpu.memory_space<vmem>>, %arg2: memref<16x8xf32, #tpu.memory_space<vmem>>, %arg3: memref<16x1xf32, #tpu.memory_space<vmem>>, %arg4: memref<8x16xf32, #tpu.memory_space<vmem>>, %arg5: memref<8x1xf32, #tpu.memory_space<vmem>>, %arg6: memref<8x64xf32, #tpu.memory_space<vmem>>) attributes {dimension_semantics = [#tpu.dimension_semantics<parallel>], iteration_bounds = array<i64: 1>, scalar_prefetch = 0 : i64, scratch_operands = 0 : i64, tpu.core_type = #tpu.core_type<tc>, window_params = [{transform_indices = @transform_0, window_bounds = array<i64: 8, 64>}, {pipeline_mode = #tpu.pipeline_mode<synchronous>, transform_indices = @transform_1, window_bounds = array<i64: 16, 8>}, {pipeline_mode = #tpu.pipeline_mode<synchronous>, transform_indices = @transform_2, window_bounds = array<i64: 16, 1>}, {pipeline_mode = #tpu.pipeline_mode<synchronous>, transform_indices = @transform_3, window_bounds = array<i64: 8, 16>}, {pipeline_mode = #tpu.pipeline_mode<synchronous>, transform_indices = @transform_4, window_bounds = array<i64: 8, 1>}, {transform_indices = @transform_5, window_bounds = array<i64: 8, 64>}]} {
    %c0 = arith.constant 0 : index
    %c0_0 = arith.constant 0 : index
    %0 = vector.load %arg1[%c0, %c0_0] : memref<8x64xf32, #tpu.memory_space<vmem>>, vector<8x64xf32>
    %1 = math.tanh %0 : vector<8x64xf32>
    %c0_1 = arith.constant 0 : index
    %c0_2 = arith.constant 0 : index
    %2 = vector.load %arg2[%c0_1, %c0_2] : memref<16x8xf32, #tpu.memory_space<vmem>>, vector<16x8xf32>
    %cst = arith.constant dense<0.000000e+00> : vector<16x64xf32>
    %3 = tpu.matmul %2, %1, %cst {dimension_numbers = #tpu.dot_dimension_numbers<[1], [0], [0], [1], [0, 0, 1, 1], [], []>} : vector<16x8xf32>, vector<8x64xf32>, vector<16x64xf32> -> vector<16x64xf32>
    %c0_3 = arith.constant 0 : index
    %c0_4 = arith.constant 0 : index
    %4 = vector.load %arg3[%c0_3, %c0_4] : memref<16x1xf32, #tpu.memory_space<vmem>>, vector<16x1xf32>
    %5 = vector.broadcast %4 : vector<16x1xf32> to vector<16x64xf32>
    %6 = arith.addf %3, %5 : vector<16x64xf32>
    %cst_5 = arith.constant 0.000000e+00 : f32
    %7 = vector.broadcast %cst_5 : f32 to vector<16x64xf32>
    %8 = arith.maximumf %6, %7 : vector<16x64xf32>
    %c0_6 = arith.constant 0 : index
    %c0_7 = arith.constant 0 : index
    %9 = vector.load %arg4[%c0_6, %c0_7] : memref<8x16xf32, #tpu.memory_space<vmem>>, vector<8x16xf32>
    %cst_8 = arith.constant dense<0.000000e+00> : vector<8x64xf32>
    %10 = tpu.matmul %9, %8, %cst_8 {dimension_numbers = #tpu.dot_dimension_numbers<[1], [0], [0], [1], [0, 0, 1, 1], [], []>} : vector<8x16xf32>, vector<16x64xf32>, vector<8x64xf32> -> vector<8x64xf32>
    %c0_9 = arith.constant 0 : index
    %c0_10 = arith.constant 0 : index
    %11 = vector.load %arg5[%c0_9, %c0_10] : memref<8x1xf32, #tpu.memory_space<vmem>>, vector<8x1xf32>
    %12 = vector.broadcast %11 : vector<8x1xf32> to vector<8x64xf32>
    %13 = arith.addf %10, %12 : vector<8x64xf32>
    %c0_11 = arith.constant 0 : index
    %c0_12 = arith.constant 0 : index
    %14 = vector.load %arg6[%c0_11, %c0_12] : memref<8x64xf32, #tpu.memory_space<vmem>>, vector<8x64xf32>
    tpu.vector_store %arg6[%c0_11, %c0_12], %13 {strides = array<i32>} : memref<8x64xf32, #tpu.memory_space<vmem>>, vector<8x64xf32>,
    return
  }
  func.func @transform_0(%arg0: i32) -> (i32, i32) {
    %c0_i32 = arith.constant 0 : i32
    %c0_i32_0 = arith.constant 0 : i32
    return %c0_i32, %arg0 : i32, i32
  }
  func.func @transform_1(%arg0: i32) -> (i32, i32) {
    %c0_i32 = arith.constant 0 : i32
    %c0_i32_0 = arith.constant 0 : i32
    %c0_i32_1 = arith.constant 0 : i32
    return %c0_i32, %c0_i32_0 : i32, i32
  }
  func.func @transform_2(%arg0: i32) -> (i32, i32) {
    %c0_i32 = arith.constant 0 : i32
    %c0_i32_0 = arith.constant 0 : i32
    %c0_i32_1 = arith.constant 0 : i32
    return %c0_i32, %c0_i32_0 : i32, i32
  }
  func.func @transform_3(%arg0: i32) -> (i32, i32) {
    %c0_i32 = arith.constant 0 : i32
    %c0_i32_0 = arith.constant 0 : i32
    %c0_i32_1 = arith.constant 0 : i32
    return %c0_i32, %c0_i32_0 : i32, i32
  }
  func.func @transform_4(%arg0: i32) -> (i32, i32) {
    %c0_i32 = arith.constant 0 : i32
    %c0_i32_0 = arith.constant 0 : i32
    %c0_i32_1 = arith.constant 0 : i32
    return %c0_i32, %c0_i32_0 : i32, i32
  }
  func.func @transform_5(%arg0: i32) -> (i32, i32) {
    %c0_i32 = arith.constant 0 : i32
    %c0_i32_0 = arith.constant 0 : i32
    return %c0_i32, %arg0 : i32, i32
  }
}

</mosaic_0001>

<llo_original>
// kernel: tpu_custom_call.1
$region0: #{tpu_custom_call.1}
  #allocation0 [shape = 'u32[]', space=smem, size = 0x4, offset = 0x4, fixed_abs, tag = 'smem constant byte address 0x4 - core index']
  #allocation1 [shape = 'u32[144,128]{1,0:T(1,128)}', space=vmem, size = 0x12000, scoped, tag = 'internal scratch']
  %s0 = inlined_call_operand.vmem [shape: f32[8,64], index: 0, kind: input, shape index: {}]
  %s1 = inlined_call_operand.vmem [shape: f32[16,8], index: 1, kind: input, shape index: {}]
  %s2 = inlined_call_operand.vmem [shape: f32[16,1], index: 2, kind: input, shape index: {}]
  %s3 = inlined_call_operand.vmem [shape: f32[8,16], index: 3, kind: input, shape index: {}]
  %s4 = inlined_call_operand.vmem [shape: f32[8,1], index: 4, kind: input, shape index: {}]
  %s5 = inlined_call_operand.hbm [shape: f32[8,64], index: 5, kind: output, shape index: {}]
  %s6 = sld [smem:[#allocation0]]
  $region30: #{tpu_custom_call.1} parent=0
    _
  %s8 = ssub.s32 1, %s6
  %s9 = scalar_select 0, %s8, %s6
  $region1: #{tpu_custom_call.1} parent=0
    #allocation2 [shape = 'u8[4096]{0}', space=vmem, size = 0x1000, scoped, tag = 'output window, operand 0, single buffered']
    #allocation3 [shape = 's32[1]{0}', space=sflag, size = 0x4, scoped, tag = 'scoped memory for tpu_custom_call.1']
    %10 = vsyncpa [#allocation3], 0
    // Predicated region
    $region2: #{tpu_custom_call.1} parent=1 // pred_check
      _
    $region3: #{tpu_custom_call.1} parent=1 // pred_check_branch
      %12 = sbr.rel (0) target = $region5
    $region4: #{tpu_custom_call.1} parent=1 // pred_region
      _
    $region5: #{tpu_custom_call.1} parent=1 // pred_fallthru
      _
    // Predicated region
    $region6: #{tpu_custom_call.1} parent=1 // pred_check
      _
    $region7: #{tpu_custom_call.1} parent=1 // pred_check_branch
      %14 = sbr.rel (0) target = $region9
    $region8: #{tpu_custom_call.1} parent=1 // pred_region
      _
    $region9: #{tpu_custom_call.1} parent=1 // pred_fallthru
      _
    // Predicated region
    $region10: #{tpu_custom_call.1} parent=1 // pred_check
      _
    $region11: #{tpu_custom_call.1} parent=1 // pred_check_branch
      %16 = sbr.rel (0) target = $region13
    $region12: #{tpu_custom_call.1} parent=1 // pred_region
      _
    $region13: #{tpu_custom_call.1} parent=1 // pred_fallthru
      _
    // Predicated region
    $region14: #{tpu_custom_call.1} parent=1 // pred_check
      _
    $region15: #{tpu_custom_call.1} parent=1 // pred_check_branch
      %18 = sbr.rel (0) target = $region17
    $region16: #{tpu_custom_call.1} parent=1 // pred_region
      _
    $region17: #{tpu_custom_call.1} parent=1 // pred_fallthru
      _
    // Predicated region
    $region18: #{tpu_custom_call.1} parent=1 // pred_check
      _
    $region19: #{tpu_custom_call.1} parent=1 // pred_check_branch
      %20 = sbr.rel (0) target = $region21
    $region20: #{tpu_custom_call.1} parent=1 // pred_region
      _
    $region21: #{tpu_custom_call.1} parent=1 // pred_fallthru
      _
    %v21 = vld [vmem:[%s0] sm:$0xff]
    %v22 = vtanh.pop %v21
    %v23 = vld [vmem:[%s1] sm:$0xff]
    %v24 = vld [vmem:[%s1 + $0x8] sm:$0xff]
    %v25 = vld [vmem:[%s2] sm:$0xff]
    %v26 = vld [vmem:[%s2 + $0x8] sm:$0xff]
    %28 = vset.pattern.permute.xlu0 0
    %29 = vperm.xlu0 %28, %v25
    %v30 = vpop.permute.xlu0 %29
    %33 = vset.pattern.permute.xlu0 0
    %34 = vperm.xlu0 %33, %v26
    %v35 = vpop.permute.xlu0 %34
    %vm37 = vcmask 64512
    %v39 = vsel %vm37, %v23, 0
    %v42 = vsel %vm37, %v24, 0
    %44 = vmatprep.subr.mxu0 0.0
    %45 = vmatpush1.msra.mxu0 %v22
    %46 = vmatprep.subr.mxu0 0.0
    %47 = vmatpush1.msra.mxu0 0.0
    %48 = vmatprep.subr.mxu0 0.0
    %49 = vmatpush1.msra.mxu0 0.0
    %50 = vmatprep.subr.mxu0 0.0
    %51 = vmatpush1.msra.mxu0 0.0
    %52 = vmatprep.subr.mxu0 0.0
    %53 = vmatpush1.msra.mxu0 0.0
    %54 = vmatprep.subr.mxu0 0.0
    %55 = vmatpush1.msra.mxu0 0.0
    %56 = vmatprep.subr.mxu0 0.0
    %57 = vmatpush1.msra.mxu0 0.0
    %58 = vmatprep.subr.mxu0 0.0
    %59 = vmatpush1.msra.mxu0 0.0
    %60 = vmatprep.subr.mxu0 0.0
    %61 = vmatpush1.msra.mxu0 0.0
    %62 = vmatprep.subr.mxu0 0.0
    %63 = vmatpush1.msra.mxu0 0.0
    %64 = vmatprep.subr.mxu0 0.0
    %65 = vmatpush1.msra.mxu0 0.0
    %66 = vmatprep.subr.mxu0 0.0
    %67 = vmatpush1.msra.mxu0 0.0
    %68 = vmatprep.subr.mxu0 0.0
    %69 = vmatpush1.msra.mxu0 0.0
    %70 = vmatprep.subr.mxu0 0.0
    %71 = vmatpush1.msra.mxu0 0.0
    %72 = vmatprep.subr.mxu0 0.0
    %73 = vmatpush1.msra.mxu0 0.0
    %74 = vmatprep.subr.mxu0 0.0
    %75 = vmatpush1.msra.mxu0 0.0
    %76 = vmatprep.subr.mxu0 0.0
    %77 = vmatpush1.msra.mxu0 0.0
    %78 = vmatprep.subr.mxu0 0.0
    %79 = vmatpush1.msra.mxu0 0.0
    %80 = vmatprep.subr.mxu0 0.0
    %81 = vmatpush1.msra.mxu0 0.0
    %82 = vmatprep.subr.mxu0 0.0
    %83 = vmatpush1.msra.mxu0 0.0
    %84 = vmatprep.subr.mxu0 0.0
    %85 = vmatpush1.msra.mxu0 0.0
    %86 = vmatprep.subr.mxu0 0.0
    %87 = vmatpush1.msra.mxu0 0.0
    %88 = vmatprep.subr.mxu0 0.0
    %89 = vmatpush1.msra.mxu0 0.0
    %90 = vmatprep.subr.mxu0 0.0
    %91 = vmatpush1.msra.mxu0 0.0
    %92 = vmatprep.subr.mxu0 0.0
    %93 = vmatpush1.msra.mxu0 0.0
    %94 = vmatprep.subr.mxu0 0.0
    %95 = vmatpush1.msra.mxu0 0.0
    %96 = vmatprep.subr.mxu0 0.0
    %97 = vmatpush1.msra.mxu0 0.0
    %98 = vmatprep.subr.mxu0 0.0
    %99 = vmatpush1.msra.mxu0 0.0
    %100 = vmatprep.subr.mxu0 0.0
    %101 = vmatpush1.msra.mxu0 0.0
    %102 = vmatprep.subr.mxu0 0.0
    %103 = vmatpush1.msra.mxu0 0.0
    %104 = vmatprep.subr.mxu0 0.0
    %105 = vmatpush1.msra.mxu0 0.0
    %106 = vmatprep.subr.mxu0 0.0
    %107 = vmatpush1.msra.mxu0 0.0
    %108 = vmatprep.mubr.f32.mxu0 0.0
    %109 = vmatmul.mubr.f32.gmra.mrb[0].mxu0 %v39
    %v110 = vpop.f32.mrb[0].mxu0
    %v111 = vadd.f32 %v30, %v110
    %v112 = vpop.f32.mrb[0].mxu0
    %113 = vmatprep.mubr.f32.mxu0 0.0
    %114 = vmatmul.mubr.f32.gmra.mrb[0].mxu0 %v42
    %v115 = vpop.f32.mrb[0].mxu0
    %v116 = vadd.f32 %v35, %v115
    %v117 = vpop.f32.mrb[0].mxu0
    %118 = vdwg.mxu0
    %v119 = vmax.f32 %v111, 0.0
    %v120 = vmax.f32 %v116, 0.0
    %v121 = vld [vmem:[%s3] sm:$0xff]
    %v122 = vld [vmem:[%s4] sm:$0xff]
    %124 = vset.pattern.permute.xlu0 0
    %125 = vperm.xlu0 %124, %v122
    %v126 = vpop.permute.xlu0 %125
    %vm128 = vcmask 130048
    %v130 = vsel %vm128, %v121, 0
    %132 = vmatprep.subr.mxu0 0.0
    %133 = vmatpush1.msra.mxu0 %v119
    %134 = vmatprep.subr.mxu0 0.0
    %135 = vmatpush1.msra.mxu0 %v120
    %136 = vmatprep.subr.mxu0 0.0
    %137 = vmatpush1.msra.mxu0 0.0
    %138 = vmatprep.subr.mxu0 0.0
    %139 = vmatpush1.msra.mxu0 0.0
    %140 = vmatprep.subr.mxu0 0.0
    %141 = vmatpush1.msra.mxu0 0.0
    %142 = vmatprep.subr.mxu0 0.0
    %143 = vmatpush1.msra.mxu0 0.0
    %144 = vmatprep.subr.mxu0 0.0
    %145 = vmatpush1.msra.mxu0 0.0
    %146 = vmatprep.subr.mxu0 0.0
    %147 = vmatpush1.msra.mxu0 0.0
    %148 = vmatprep.subr.mxu0 0.0
    %149 = vmatpush1.msra.mxu0 0.0
    %150 = vmatprep.subr.mxu0 0.0
    %151 = vmatpush1.msra.mxu0 0.0
    %152 = vmatprep.subr.mxu0 0.0
    %153 = vmatpush1.msra.mxu0 0.0
    %154 = vmatprep.subr.mxu0 0.0
    %155 = vmatpush1.msra.mxu0 0.0
    %156 = vmatprep.subr.mxu0 0.0
    %157 = vmatpush1.msra.mxu0 0.0
    %158 = vmatprep.subr.mxu0 0.0
    %159 = vmatpush1.msra.mxu0 0.0
    %160 = vmatprep.subr.mxu0 0.0
    %161 = vmatpush1.msra.mxu0 0.0
    %162 = vmatprep.subr.mxu0 0.0
    %163 = vmatpush1.msra.mxu0 0.0
    %164 = vmatprep.subr.mxu0 0.0
    %165 = vmatpush1.msra.mxu0 0.0
    %166 = vmatprep.subr.mxu0 0.0
    %167 = vmatpush1.msra.mxu0 0.0
    %168 = vmatprep.subr.mxu0 0.0
    %169 = vmatpush1.msra.mxu0 0.0
    %170 = vmatprep.subr.mxu0 0.0
    %171 = vmatpush1.msra.mxu0 0.0
    %172 = vmatprep.subr.mxu0 0.0
    %173 = vmatpush1.msra.mxu0 0.0
    %174 = vmatprep.subr.mxu0 0.0
    %175 = vmatpush1.msra.mxu0 0.0
    %176 = vmatprep.subr.mxu0 0.0
    %177 = vmatpush1.msra.mxu0 0.0
    %178 = vmatprep.subr.mxu0 0.0
    %179 = vmatpush1.msra.mxu0 0.0
    %180 = vmatprep.subr.mxu0 0.0
    %181 = vmatpush1.msra.mxu0 0.0
    %182 = vmatprep.subr.mxu0 0.0
    %183 = vmatpush1.msra.mxu0 0.0
    %184 = vmatprep.subr.mxu0 0.0
    %185 = vmatpush1.msra.mxu0 0.0
    %186 = vmatprep.subr.mxu0 0.0
    %187 = vmatpush1.msra.mxu0 0.0
    %188 = vmatprep.subr.mxu0 0.0
    %189 = vmatpush1.msra.mxu0 0.0
    %190 = vmatprep.subr.mxu0 0.0
    %191 = vmatpush1.msra.mxu0 0.0
    %192 = vmatprep.subr.mxu0 0.0
    %193 = vmatpush1.msra.mxu0 0.0
    %194 = vmatprep.subr.mxu0 0.0
    %195 = vmatpush1.msra.mxu0 0.0
    %196 = vmatprep.mubr.f32.mxu0 0.0
    %197 = vmatmul.mubr.f32.gmra.mrb[0].mxu0 %v130
    %v198 = vpop.f32.mrb[0].mxu0
    %v199 = vadd.f32 %v126, %v198
    %v200 = vpop.f32.mrb[0].mxu0
    %201 = vdwg.mxu0
    %vm202 = vcmask 523264
    %203 = vst.msk [vmem:[#allocation2] sm:$0xff] %vm202, %v199
    // Predicated region
    $region22: #{tpu_custom_call.1} parent=1 // pred_check
      _
    $region23: #{tpu_custom_call.1} parent=1 // pred_check_branch
      %205 = sbr.rel (0) target = $region25
    $region24: #{tpu_custom_call.1} parent=1 // pred_region
      %s207 = ssub.s32 128, 128
      %208 = vsyncadd [#allocation3], %s207
      %s210 = sshll.u32 [#allocation2], 4
      %s211 = int_to_ptr.vmem [resolvable:$true] %s210
      %213 = dma.vmem_to_hbm [thread:$0]  %s211, 128, %s5, [#allocation3]
    $region25: #{tpu_custom_call.1} parent=1 // pred_fallthru
      _
    // Predicated region
    $region26: #{tpu_custom_call.1} parent=1 // pred_check
      _
    $region27: #{tpu_custom_call.1} parent=1 // pred_check_branch
      %215 = sbr.rel (0) target = $region29
    $region28: #{tpu_custom_call.1} parent=1 // pred_region
      %216 = dma.done [#allocation3], 128
    $region29: #{tpu_custom_call.1} parent=1 // pred_fallthru
      _
    %217 = vsyncpa [#allocation3], 1

</llo_original>
